<compile_context>
chip_gen: v5e
topology: v5e:2x2
jax: 0.10.0
libtpu: 0.0.40
codegen_flags: <defaults>
</compile_context>

<pallas_src>
import functools

import jax
import jax.numpy as jnp
from jax.experimental import pallas as pl
from jax.experimental.pallas import tpu as pltpu


def _round_up(x, m):
    return ((x + m - 1) // m) * m


def highway_kernel(x_ref, w_ref, b_ref, o_ref, *, d_pad):
    """Fused highway forward on one row tile.

    x_ref: [tm, Dp]    f32   row tile of tokens
    w_ref: [Dp, 2*Dp]  bf16  fused [Wp | Wg], resident across the grid
    b_ref: [1, 2*Dp]   f32   fused [bp | bg]
    o_ref: [tm, Dp]    f32
    """
    x = x_ref[...]                                            # [tm, Dp] f32
    # Single fused MXU pass: bf16 inputs, f32 accumulation.
    y = jnp.dot(x.astype(jnp.bfloat16), w_ref[...],
                preferred_element_type=jnp.float32) + b_ref[...]
    proj = jnp.maximum(y[:, :d_pad], 0.0)                     # relu(x Wp + bp)
    gate = jax.nn.sigmoid(y[:, d_pad:])                       # sigmoid(x Wg + bg)
    # Highway combine (all f32); dropout == identity at inference.
    o_ref[...] = (proj * gate + (1.0 - gate) * x).astype(o_ref.dtype)


def highway_forward(x, wp, bp, wg, bg, *, tm=256):
    """x: [N, D] f32. wp/wg: [D, D] stored so y = x @ W. bp/bg: [1, D]."""
    N, D = x.shape
    f32 = jnp.float32

    # Lane-dense layout: pad the feature dim to a multiple of 128.
    Dp = _round_up(D, 128)
    # Row tile: large enough to feed the MXU / amortize grid-step overhead,
    # but no bigger than the (8-aligned) number of rows we actually have.
    tm = min(tm, max(8, _round_up(N, 8)))
    Np = _round_up(N, tm)
    n_rows = Np // tm

    # Fuse the two linear layers into one [Dp, 2*Dp] weight (bf16 for the MXU)
    # and one [1, 2*Dp] bias (kept f32). Zero padding keeps padded lanes inert:
    # padded cols give proj=0, gate=0.5, x=0 -> out=0, sliced away below.
    w_fused = jnp.zeros((Dp, 2 * Dp), f32)
    w_fused = w_fused.at[:D, :D].set(wp).at[:D, Dp:Dp + D].set(wg)
    w_fused = w_fused.astype(jnp.bfloat16)
    b_fused = jnp.zeros((1, 2 * Dp), f32)
    b_fused = b_fused.at[:, :D].set(bp).at[:, Dp:Dp + D].set(bg)

    x_pad = jnp.zeros((Np, Dp), x.dtype).at[:N, :D].set(x)

    # VMEM budget: double-buffered resident weights/bias + double-buffered x/out tiles.
    # (On v7x keep this under ~56 MiB: shrink tm or tile the weight's output dim.)
    w_bytes = w_fused.size * 2 + b_fused.size * 4
    tile_bytes = tm * Dp * 4
    needed = 2 * (w_bytes + 2 * tile_bytes)
    vmem_limit = int(min(max(2 * needed, 32 * 2**20), 128 * 2**20))

    cost = pl.CostEstimate(
        flops=2 * Np * Dp * (2 * Dp) + 6 * Np * Dp,
        transcendentals=Np * Dp,                              # sigmoid
        bytes_accessed=x_pad.size * 4 + w_fused.size * 2
                       + b_fused.size * 4 + Np * Dp * 4,
    )

    kernel = functools.partial(highway_kernel, d_pad=Dp)
    out = pl.pallas_call(
        kernel,
        out_shape=jax.ShapeDtypeStruct((Np, Dp), x.dtype),
        grid_spec=pltpu.PrefetchScalarGridSpec(
            num_scalar_prefetch=0,
            grid=(n_rows,),
            in_specs=[
                pl.BlockSpec((tm, Dp), lambda i: (i, 0)),        # x row tile
                pl.BlockSpec((Dp, 2 * Dp), lambda i: (0, 0)),    # fused [Wp|Wg], resident
                pl.BlockSpec((1, 2 * Dp), lambda i: (0, 0)),     # fused [bp|bg], resident
            ],
            out_specs=pl.BlockSpec((tm, Dp), lambda i: (i, 0)),
        ),
        compiler_params=pltpu.CompilerParams(
            dimension_semantics=("parallel",),                   # row axis shards across TCs
            vmem_limit_bytes=vmem_limit,
        ),
        cost_estimate=cost,
    )(x_pad, w_fused, b_fused)
    # Strip N / D padding (glue).
    return out[:N, :D]


def highway_ref(x, wp, bp, wg, bg):
    proj = jax.nn.relu(x @ wp + bp)
    gate = jax.nn.sigmoid(x @ wg + bg)
    return proj * gate + (1.0 - gate) * x


if __name__ == "__main__":
    # Small, deterministic setup: batch=2, seq=8, word_dim=32
    batch, seq, word_dim = 2, 8, 32
    key = jax.random.PRNGKey(0)
    kx, kwp, kbp, kwg, kbg = jax.random.split(key, 5)

    x3 = jax.random.normal(kx, (batch, seq, word_dim), dtype=jnp.float32)
    # Linear(word_dim, word_dim) params; stored transposed ([in, out]) for x @ W.
    scale = 1.0 / jnp.sqrt(word_dim)
    wp = jax.random.uniform(kwp, (word_dim, word_dim), jnp.float32, -scale, scale)
    bp = jax.random.uniform(kbp, (1, word_dim), jnp.float32, -scale, scale)
    wg = jax.random.uniform(kwg, (word_dim, word_dim), jnp.float32, -scale, scale)
    bg = jax.random.uniform(kbg, (1, word_dim), jnp.float32, -scale, scale)

    x = x3.reshape(batch * seq, word_dim)            # flatten leading dims (glue)
    out = highway_forward(x, wp, bp, wg, bg)
    out = jax.block_until_ready(out)

    ref = highway_ref(x, wp, bp, wg, bg)
    assert out.shape == (batch * seq, word_dim)
    # bf16 MXU matmul vs f32 reference -> loosened tolerance.
    assert jnp.allclose(out, ref, atol=3e-2, rtol=3e-2), "mismatch vs reference"

    # reshape back to [batch, seq, word_dim] (glue)
    _ = out.reshape(batch, seq, word_dim)
    print("KERNEL_OK")
</pallas_src>

<mosaic_0001>
module attributes {stable_mosaic.version = 11 : i64} {
  func.func @highway_kernel(%arg0: i32, %arg1: memref<16x128xf32, #tpu.memory_space<vmem>>, %arg2: memref<128x256xbf16, #tpu.memory_space<vmem>>, %arg3: memref<1x256xf32, #tpu.memory_space<vmem>>, %arg4: memref<16x128xf32, #tpu.memory_space<vmem>>) attributes {dimension_semantics = [#tpu.dimension_semantics<parallel>], iteration_bounds = array<i64: 1>, scalar_prefetch = 0 : i64, scratch_operands = 0 : i64, tpu.core_type = #tpu.core_type<tc>, window_params = [{transform_indices = @transform_0, window_bounds = array<i64: 16, 128>}, {pipeline_mode = #tpu.pipeline_mode<synchronous>, transform_indices = @transform_1, window_bounds = array<i64: 128, 256>}, {pipeline_mode = #tpu.pipeline_mode<synchronous>, transform_indices = @transform_2, window_bounds = array<i64: 1, 256>}, {transform_indices = @transform_3, window_bounds = array<i64: 16, 128>}]} {
    %c0 = arith.constant 0 : index
    %c0_0 = arith.constant 0 : index
    %0 = vector.load %arg1[%c0, %c0_0] : memref<16x128xf32, #tpu.memory_space<vmem>>, vector<16x128xf32>
    %1 = arith.truncf %0 : vector<16x128xf32> to vector<16x128xbf16>
    %c0_1 = arith.constant 0 : index
    %c0_2 = arith.constant 0 : index
    %2 = vector.load %arg2[%c0_1, %c0_2] : memref<128x256xbf16, #tpu.memory_space<vmem>>, vector<128x256xbf16>
    %cst = arith.constant dense<0.000000e+00> : vector<16x256xf32>
    %3 = tpu.matmul %1, %2, %cst {dimension_numbers = #tpu.dot_dimension_numbers<[1], [0], [0], [1], [0, 0, 1, 1], [], []>} : vector<16x128xbf16>, vector<128x256xbf16>, vector<16x256xf32> -> vector<16x256xf32>
    %c0_3 = arith.constant 0 : index
    %c0_4 = arith.constant 0 : index
    %4 = vector.load %arg3[%c0_3, %c0_4] : memref<1x256xf32, #tpu.memory_space<vmem>>, vector<1x256xf32>
    %5 = vector.broadcast %4 : vector<1x256xf32> to vector<16x256xf32>
    %6 = arith.addf %3, %5 : vector<16x256xf32>
    %7 = vector.extract_strided_slice %6 {offsets = [0, 0], sizes = [16, 128], strides = [1, 1]} : vector<16x256xf32> to vector<16x128xf32>
    %cst_5 = arith.constant 0.000000e+00 : f32
    %8 = vector.broadcast %cst_5 : f32 to vector<16x128xf32>
    %9 = arith.maximumf %7, %8 : vector<16x128xf32>
    %10 = vector.extract_strided_slice %6 {offsets = [0, 128], sizes = [16, 128], strides = [1, 1]} : vector<16x256xf32> to vector<16x128xf32>
    %11 = arith.negf %10 : vector<16x128xf32>
    %12 = math.exp %11 : vector<16x128xf32>
    %cst_6 = arith.constant 1.000000e+00 : f32
    %13 = vector.broadcast %cst_6 : f32 to vector<16x128xf32>
    %14 = arith.addf %13, %12 : vector<16x128xf32>
    %15 = arith.divf %13, %14 : vector<16x128xf32>
    %16 = arith.mulf %9, %15 : vector<16x128xf32>
    %cst_7 = arith.constant 1.000000e+00 : f32
    %17 = vector.broadcast %cst_7 : f32 to vector<16x128xf32>
    %18 = arith.subf %17, %15 : vector<16x128xf32>
    %19 = arith.mulf %18, %0 : vector<16x128xf32>
    %20 = arith.addf %16, %19 : vector<16x128xf32>
    %c0_8 = arith.constant 0 : index
    %c0_9 = arith.constant 0 : index
    %21 = vector.load %arg4[%c0_8, %c0_9] : memref<16x128xf32, #tpu.memory_space<vmem>>, vector<16x128xf32>
    tpu.vector_store %arg4[%c0_8, %c0_9], %20 {strides = array<i32>} : memref<16x128xf32, #tpu.memory_space<vmem>>, vector<16x128xf32>,
    return
  }
  func.func @transform_0(%arg0: i32) -> (i32, i32) {
    %c0_i32 = arith.constant 0 : i32
    %c0_i32_0 = arith.constant 0 : i32
    return %arg0, %c0_i32 : i32, i32
  }
  func.func @transform_1(%arg0: i32) -> (i32, i32) {
    %c0_i32 = arith.constant 0 : i32
    %c0_i32_0 = arith.constant 0 : i32
    %c0_i32_1 = arith.constant 0 : i32
    return %c0_i32, %c0_i32_0 : i32, i32
  }
  func.func @transform_2(%arg0: i32) -> (i32, i32) {
    %c0_i32 = arith.constant 0 : i32
    %c0_i32_0 = arith.constant 0 : i32
    %c0_i32_1 = arith.constant 0 : i32
    return %c0_i32, %c0_i32_0 : i32, i32
  }
  func.func @transform_3(%arg0: i32) -> (i32, i32) {
    %c0_i32 = arith.constant 0 : i32
    %c0_i32_0 = arith.constant 0 : i32
    return %arg0, %c0_i32 : i32, i32
  }
}

</mosaic_0001>

<llo_original>
// kernel: tpu_custom_call.1
$region0: #{tpu_custom_call.1}
  #allocation0 [shape = 'u32[]', space=smem, size = 0x4, offset = 0x4, fixed_abs, tag = 'smem constant byte address 0x4 - core index']
  #allocation1 [shape = 'u32[72,128]{1,0:T(1,128)}', space=vmem, size = 0x9000, scoped, tag = 'internal scratch']
  %s0 = inlined_call_operand.hbm [shape: f32[16,128], index: 0, kind: input, shape index: {}]
  %s1 = inlined_call_operand.hbm [shape: bf16[128,256], index: 1, kind: input, shape index: {}]
  %s2 = inlined_call_operand.hbm [shape: f32[1,256], index: 2, kind: input, shape index: {}]
  %s3 = inlined_call_operand.hbm [shape: f32[16,128], index: 3, kind: output, shape index: {}]
  %s4 = sld [smem:[#allocation0]]
  $region34: #{tpu_custom_call.1} parent=0
    _
  %s6 = ssub.s32 1, %s4
  %s7 = scalar_select 0, %s6, %s4
  $region1: #{tpu_custom_call.1} parent=0
    #allocation2 [shape = 'u8[8192]{0}', space=vmem, size = 0x2000, scoped, tag = 'input window, operand 0, single buffered']
    #allocation3 [shape = 's32[1]{0}', space=sflag, size = 0x4, scoped, tag = 'scoped memory for tpu_custom_call.1']
    #allocation4 [shape = 's32[1]{0}', space=sflag, size = 0x4, scoped, tag = 'scoped memory for tpu_custom_call.1']
    #allocation5 [shape = 'u8[65536]{0}', space=vmem, size = 0x10000, scoped, tag = 'input window, operand 1, single buffered']
    #allocation6 [shape = 's32[1]{0}', space=sflag, size = 0x4, scoped, tag = 'scoped memory for tpu_custom_call.1']
    #allocation7 [shape = 'u8[1024]{0}', space=vmem, size = 0x400, scoped, tag = 'input window, operand 2, single buffered']
    #allocation8 [shape = 'u8[8192]{0}', space=vmem, size = 0x2000, scoped, tag = 'output window, operand 0, single buffered']
    %8 = vsyncpa [#allocation3], 0
    %9 = vsyncpa [#allocation6], 0
    %10 = vsyncpa [#allocation4], 0
    // Predicated region
    $region2: #{tpu_custom_call.1} parent=1 // pred_check
      _
    $region3: #{tpu_custom_call.1} parent=1 // pred_check_branch
      %12 = sbr.rel (0) target = $region5
    $region4: #{tpu_custom_call.1} parent=1 // pred_region
      %14 = vsyncadd [#allocation3], 0
      %s15 = sshll.u32 %s0, 4
      %s16 = int_to_ptr.hbm [resolvable:$true] %s15
      %s17 = sshll.u32 [#allocation2], 4
      %s18 = int_to_ptr.vmem [resolvable:$true] %s17
      %23 = dma.hbm_to_vmem [thread:$0]  %s16, 256, %s18, [#allocation3], 128, 128, 8
    $region5: #{tpu_custom_call.1} parent=1 // pred_fallthru
      _
    // Predicated region
    $region6: #{tpu_custom_call.1} parent=1 // pred_check
      _
    $region7: #{tpu_custom_call.1} parent=1 // pred_check_branch
      %25 = sbr.rel (0) target = $region9
    $region8: #{tpu_custom_call.1} parent=1 // pred_region
      %27 = vsyncadd [#allocation6], 0
      %s28 = sshll.u32 %s1, 4
      %s29 = int_to_ptr.hbm [resolvable:$true] %s28
      %s30 = sshll.u32 [#allocation5], 4
      %s31 = int_to_ptr.vmem [resolvable:$true] %s30
      %36 = dma.hbm_to_vmem [thread:$0]  %s29, 2048, %s31, [#allocation6], 128, 128, 8
    $region9: #{tpu_custom_call.1} parent=1 // pred_fallthru
      _
    // Predicated region
    $region10: #{tpu_custom_call.1} parent=1 // pred_check
      _
    $region11: #{tpu_custom_call.1} parent=1 // pred_check_branch
      %38 = sbr.rel (0) target = $region13
    $region12: #{tpu_custom_call.1} parent=1 // pred_region
      %40 = vsyncadd [#allocation6], 0
      %s42 = sshll.u32 %s2, 4
      %s43 = int_to_ptr.hbm [resolvable:$true] %s42
      %s44 = sshll.u32 [#allocation7], 4
      %s45 = int_to_ptr.vmem [resolvable:$true] %s44
      %47 = dma.hbm_to_vmem [thread:$0]  %s43, 32, %s45, [#allocation6]
    $region13: #{tpu_custom_call.1} parent=1 // pred_fallthru
      _
    // Predicated region
    $region14: #{tpu_custom_call.1} parent=1 // pred_check
      _
    $region15: #{tpu_custom_call.1} parent=1 // pred_check_branch
      %49 = sbr.rel (0) target = $region17
    $region16: #{tpu_custom_call.1} parent=1 // pred_region
      %51 = dma.done [#allocation3], 256
    $region17: #{tpu_custom_call.1} parent=1 // pred_fallthru
      _
    // Predicated region
    $region18: #{tpu_custom_call.1} parent=1 // pred_check
      _
    $region19: #{tpu_custom_call.1} parent=1 // pred_check_branch
      %53 = sbr.rel (0) target = $region21
    $region20: #{tpu_custom_call.1} parent=1 // pred_region
      %55 = dma.done [#allocation6], 2048
    $region21: #{tpu_custom_call.1} parent=1 // pred_fallthru
      _
    // Predicated region
    $region22: #{tpu_custom_call.1} parent=1 // pred_check
      _
    $region23: #{tpu_custom_call.1} parent=1 // pred_check_branch
      %57 = sbr.rel (0) target = $region25
    $region24: #{tpu_custom_call.1} parent=1 // pred_region
      %59 = dma.done [#allocation6], 32
    $region25: #{tpu_custom_call.1} parent=1 // pred_fallthru
      _
    %v60 = vld [vmem:[#allocation2] sm:$0xff]
    %v61 = vld [vmem:[#allocation2 + $0x8] sm:$0xff]
    %v62 = vpack.c.bf16 %v61, %v60
    %v63 = vld [vmem:[#allocation5] sm:$0xff]
    %v64 = vld [vmem:[#allocation5 + $0x8] sm:$0xff]
    %v65 = vld [vmem:[#allocation5 + $0x10] sm:$0xff]
    %v66 = vld [vmem:[#allocation5 + $0x18] sm:$0xff]
    %v67 = vld [vmem:[#allocation5 + $0x20] sm:$0xff]
    %v68 = vld [vmem:[#allocation5 + $0x28] sm:$0xff]
    %v69 = vld [vmem:[#allocation5 + $0x30] sm:$0xff]
    %v70 = vld [vmem:[#allocation5 + $0x38] sm:$0xff]
    %v71 = vld [vmem:[#allocation5 + $0x40] sm:$0xff]
    %v72 = vld [vmem:[#allocation5 + $0x48] sm:$0xff]
    %v73 = vld [vmem:[#allocation5 + $0x50] sm:$0xff]
    %v74 = vld [vmem:[#allocation5 + $0x58] sm:$0xff]
    %v75 = vld [vmem:[#allocation5 + $0x60] sm:$0xff]
    %v76 = vld [vmem:[#allocation5 + $0x68] sm:$0xff]
    %v77 = vld [vmem:[#allocation5 + $0x70] sm:$0xff]
    %v78 = vld [vmem:[#allocation5 + $0x78] sm:$0xff]
    %v79 = vld [vmem:[#allocation7] sm:$0x3]
    %v81 = vperm.slane %v79, 0
    %v82 = vperm.slane %v79, 1
    %v101 = vunpack.c.l.b16 %v63
    %v102 = vunpack.c.h.b16 %v63
    %v103 = vunpack.c.l.b16 %v64
    %v104 = vunpack.c.h.b16 %v64
    %v105 = vunpack.c.l.b16 %v65
    %v106 = vunpack.c.h.b16 %v65
    %v107 = vunpack.c.l.b16 %v66
    %v108 = vunpack.c.h.b16 %v66
    %v109 = vunpack.c.l.b16 %v67
    %v110 = vunpack.c.h.b16 %v67
    %v111 = vunpack.c.l.b16 %v68
    %v112 = vunpack.c.h.b16 %v68
    %v113 = vunpack.c.l.b16 %v69
    %v114 = vunpack.c.h.b16 %v69
    %v115 = vunpack.c.l.b16 %v70
    %v116 = vunpack.c.h.b16 %v70
    %v117 = vunpack.c.l.b16 %v71
    %v118 = vunpack.c.h.b16 %v71
    %v119 = vunpack.c.l.b16 %v72
    %v120 = vunpack.c.h.b16 %v72
    %v121 = vunpack.c.l.b16 %v73
    %v122 = vunpack.c.h.b16 %v73
    %v123 = vunpack.c.l.b16 %v74
    %v124 = vunpack.c.h.b16 %v74
    %v125 = vunpack.c.l.b16 %v75
    %v126 = vunpack.c.h.b16 %v75
    %v127 = vunpack.c.l.b16 %v76
    %v128 = vunpack.c.h.b16 %v76
    %v129 = vunpack.c.l.b16 %v77
    %v130 = vunpack.c.h.b16 %v77
    %v131 = vunpack.c.l.b16 %v78
    %v132 = vunpack.c.h.b16 %v78
    %v133 = vpack.c.b16 %v103, %v101
    %v134 = vpack.c.b16 %v104, %v102
    %v135 = vpack.c.b16 %v107, %v105
    %v136 = vpack.c.b16 %v108, %v106
    %v137 = vpack.c.b16 %v111, %v109
    %v138 = vpack.c.b16 %v112, %v110
    %v139 = vpack.c.b16 %v115, %v113
    %v140 = vpack.c.b16 %v116, %v114
    %v141 = vpack.c.b16 %v119, %v117
    %v142 = vpack.c.b16 %v120, %v118
    %v143 = vpack.c.b16 %v123, %v121
    %v144 = vpack.c.b16 %v124, %v122
    %v145 = vpack.c.b16 %v127, %v125
    %v146 = vpack.c.b16 %v128, %v126
    %v147 = vpack.c.b16 %v131, %v129
    %v148 = vpack.c.b16 %v132, %v130
    %165 = vmatpush.bf16.msra.mxu0 %v147
    %166 = vmatpush.bf16.msra.mxu0 %v145
    %167 = vmatpush.bf16.msra.mxu0 %v143
    %168 = vmatpush.bf16.msra.mxu0 %v141
    %169 = vmatpush.bf16.msra.mxu0 %v139
    %170 = vmatpush.bf16.msra.mxu0 %v137
    %171 = vmatpush.bf16.msra.mxu0 %v135
    %172 = vmatpush.bf16.msra.mxu0 %v133
    %173 = vmatmul.bf16.gmra.mxu0 %v62
    %v174 = vpop.f32.mrf.mxu0
    %v175 = vadd.f32 %v81, %v174
    %v176 = vpop.f32.mrf.mxu0
    %v177 = vadd.f32 %v81, %v176
    %178 = vdwg.mxu0
    %179 = vmatpush.bf16.msra.mxu0 %v148
    %180 = vmatpush.bf16.msra.mxu0 %v146
    %181 = vmatpush.bf16.msra.mxu0 %v144
    %182 = vmatpush.bf16.msra.mxu0 %v142
    %183 = vmatpush.bf16.msra.mxu0 %v140
    %184 = vmatpush.bf16.msra.mxu0 %v138
    %185 = vmatpush.bf16.msra.mxu0 %v136
    %186 = vmatpush.bf16.msra.mxu0 %v134
    %187 = vmatmul.bf16.gmra.mxu0 %v62
    %v188 = vpop.f32.mrf.mxu0
    %v189 = vadd.f32 %v82, %v188
    %v190 = vpop.f32.mrf.mxu0
    %v191 = vadd.f32 %v82, %v190
    %192 = vdwg.mxu0
    %v193 = vmax.f32 %v175, 0.0
    %v194 = vmax.f32 %v177, 0.0
    %v195 = vxor.u32 %v189, 2147483648
    %v196 = vxor.u32 %v191, 2147483648
    %v197 = vmul.f32 %v195, 1.442695
    %v198 = vpow.pop %v197
    %v199 = vmul.f32 %v196, 1.442695
    %v200 = vpow.pop %v199
    %v201 = vadd.f32 %v198, 1.0
    %v202 = vadd.f32 %v200, 1.0
    %v203 = vrcp.pop %v201
    %v204 = vmul.f32 %v201, %v203
    %v205 = vsub.f32 1.0, %v204
    %v206 = vmul.f32 %v203, %v205
    %v207 = vadd.f32 %v203, %v206
    %vm208 = vweird.f32 %v201
    %vm209 = vweird.f32 %v203
    %vm210 = vmor %vm208, %vm209
    %v211 = vsel %vm210, %v203, %v207
    %v212 = vand.u32 2147483647, %v201
    %vm213 = vcmp.eq.f32.partialorder %v212, 8.507059e+37
    %v214 = vand.u32 %v201, 2147483648
    %v215 = vor.u32 1.1754944e-38, %v214
    %v216 = vsel %vm213, %v215, %v211
    %v217 = vmul.f32 1.0, %v216
    %v218 = vrcp.pop %v202
    %v219 = vmul.f32 %v202, %v218
    %v220 = vsub.f32 1.0, %v219
    %v221 = vmul.f32 %v218, %v220
    %v222 = vadd.f32 %v218, %v221
    %vm223 = vweird.f32 %v202
    %vm224 = vweird.f32 %v218
    %vm225 = vmor %vm223, %vm224
    %v226 = vsel %vm225, %v218, %v222
    %v227 = vand.u32 2147483647, %v202
    %vm228 = vcmp.eq.f32.partialorder %v227, 8.507059e+37
    %v229 = vand.u32 %v202, 2147483648
    %v230 = vor.u32 1.1754944e-38, %v229
    %v231 = vsel %vm228, %v230, %v226
    %v232 = vmul.f32 1.0, %v231
    %v233 = vmul.f32 %v193, %v217
    %v234 = vmul.f32 %v194, %v232
    %v235 = vsub.f32 1.0, %v217
    %v236 = vsub.f32 1.0, %v232
    %v237 = vmul.f32 %v235, %v60
    %v238 = vmul.f32 %v236, %v61
    %v239 = vadd.f32 %v233, %v237
    %v240 = vadd.f32 %v234, %v238
    %241 = vst [vmem:[#allocation8] sm:$0xff] %v239
    %242 = vst [vmem:[#allocation8 + $0x8] sm:$0xff] %v240
    // Predicated region
    $region26: #{tpu_custom_call.1} parent=1 // pred_check
      _
    $region27: #{tpu_custom_call.1} parent=1 // pred_check_branch
      %244 = sbr.rel (0) target = $region29
    $region28: #{tpu_custom_call.1} parent=1 // pred_region
      %246 = vsyncadd [#allocation4], 0
      %s247 = sshll.u32 [#allocation8], 4
      %s248 = int_to_ptr.vmem [resolvable:$true] %s247
      %s249 = sshll.u32 %s3, 4
      %s250 = int_to_ptr.hbm [resolvable:$true] %s249
      %255 = dma.vmem_to_hbm [thread:$0]  %s248, 256, %s250, [#allocation4], 128, 128, 8
    $region29: #{tpu_custom_call.1} parent=1 // pred_fallthru
      _
    // Predicated region
    $region30: #{tpu_custom_call.1} parent=1 // pred_check
      _
    $region31: #{tpu_custom_call.1} parent=1 // pred_check_branch
      %257 = sbr.rel (0) target = $region33
    $region32: #{tpu_custom_call.1} parent=1 // pred_region
      %259 = dma.done [#allocation4], 256
    $region33: #{tpu_custom_call.1} parent=1 // pred_fallthru
      _
    %260 = vsyncpa [#allocation3], 1
    %261 = vsyncpa [#allocation6], 1
    %262 = vsyncpa [#allocation4], 1

</llo_original>
